<compile_context>
chip_gen: v7x
topology: tpu7x:2x2x1
jax: 0.10.0
libtpu: 0.0.40
codegen_flags: <defaults>
</compile_context>

<pallas_src>
import jax
import jax.numpy as jnp
from jax.experimental import pallas as pl
from jax.experimental.pallas import tpu as pltpu


def _round_up(x, m):
    return ((x + m - 1) // m) * m


def mlp_kernel(x_ref, w1_ref, b1_ref, w2_ref, b2_ref, o_ref):
    # x arrives as f32 straight from HBM; bf16 pack happens on the VPU here
    # (free — DMA/MXU are the binding slots), avoiding a wrapper-side copy.
    x_bf = x_ref[...].astype(jnp.bfloat16)
    # fc1: (tm, C_in) bf16 @ (C_in, H) bf16 -> f32 accumulation on the MXU.
    h = jnp.dot(x_bf, w1_ref[...], preferred_element_type=jnp.float32)
    # Bias + ReLU in f32 on the VPU (v5e has no bf16 VPU).
    h = jnp.maximum(h + b1_ref[...], 0.0)
    # fc2: (tm, H) bf16 @ (H, N_pad) bf16 -> f32 accumulation on the MXU.
    y = jnp.dot(h.astype(jnp.bfloat16), w2_ref[...],
                preferred_element_type=jnp.float32)
    o_ref[...] = (y + b2_ref[...]).astype(o_ref.dtype)


def prepare_params(w1, b1, w2, b2):
    """One-time parameter preprocessing, hoisted out of the per-call path:
    bf16 MXU operands for the weights and lane-padding of W2/b2 to 128 output
    lanes so the kernel's final store is an unmasked, lane-dense vst."""
    C_in, H = w1.shape
    C_out = w2.shape[1]
    N_pad = _round_up(max(C_out, 128), 128)
    w1_b = w1.astype(jnp.bfloat16)
    b1_p = jnp.asarray(b1, jnp.float32).reshape(1, H)
    w2_b = jnp.pad(w2.astype(jnp.bfloat16), ((0, 0), (0, N_pad - C_out)))
    b2_p = jnp.pad(jnp.asarray(b2, jnp.float32).reshape(1, C_out),
                   ((0, 0), (0, N_pad - C_out)))
    return {"w1": w1_b, "b1": b1_p, "w2": w2_b, "b2": b2_p,
            "c_out": C_out, "n_pad": N_pad}


def _choose_tm(B):
    """Batch-tile heuristic (see header). Returns a multiple of 8."""
    B8 = _round_up(B, 8)
    min_tile, max_tile, target_steps = 256, 1024, 4
    if B8 <= min_tile:
        return B8                                  # single tile = whole batch
    tm = _round_up(pl.cdiv(B8, target_steps), 8)   # >=4 steps (2 per v7x TC)
    return max(min_tile, min(tm, max_tile))


def two_layer_forward(x, params, *, tm=None):
    """Forward pass. x: (B, C_in) f32 -> (B, C_out) f32."""
    B, C_in = x.shape
    H = params["w1"].shape[1]
    N_pad = params["n_pad"]
    C_out = params["c_out"]

    if tm is None:
        tm = _choose_tm(B)
    else:
        tm = _round_up(max(8, min(tm, _round_up(B, 8))), 8)
    B_pad = _round_up(B, tm)

    # Keep x in its incoming dtype; zero-pad the batch only when needed.
    x_p = x if B_pad == B else jnp.pad(x, ((0, B_pad - B), (0, 0)))

    grid = (B_pad // tm,)

    flops = 2 * B_pad * C_in * H + 2 * B_pad * H * N_pad
    bytes_accessed = (x_p.size * x_p.dtype.itemsize
                      + params["w1"].size * 2 + params["b1"].size * 4
                      + params["w2"].size * 2 + params["b2"].size * 4
                      + B_pad * N_pad * 4)

    out = pl.pallas_call(
        mlp_kernel,
        out_shape=jax.ShapeDtypeStruct((B_pad, N_pad), jnp.float32),
        grid_spec=pltpu.PrefetchScalarGridSpec(
            num_scalar_prefetch=0,
            grid=grid,
            in_specs=[
                pl.BlockSpec((tm, C_in), lambda i: (i, 0)),    # x tile (f32)
                # Constant index_maps -> weights fetched once, stay resident.
                pl.BlockSpec((C_in, H), lambda i: (0, 0)),     # W1 (bf16)
                pl.BlockSpec((1, H), lambda i: (0, 0)),        # b1 (f32)
                pl.BlockSpec((H, N_pad), lambda i: (0, 0)),    # W2 (bf16, padded)
                pl.BlockSpec((1, N_pad), lambda i: (0, 0)),    # b2 (f32, padded)
            ],
            out_specs=pl.BlockSpec((tm, N_pad), lambda i: (i, 0)),
        ),
        compiler_params=pltpu.CompilerParams(
            dimension_semantics=("parallel",)),
        cost_estimate=pl.CostEstimate(
            flops=flops, transcendentals=0, bytes_accessed=bytes_accessed),
    )(x_p, params["w1"], params["b1"], params["w2"], params["b2"])

    return out[:B, :C_out]


def two_layer_classifier(x, w1, b1, w2, b2, *, tm=None):
    """Convenience one-shot wrapper (prepare + forward)."""
    return two_layer_forward(x, prepare_params(w1, b1, w2, b2), tm=tm)


def init_params(key, in_channel=768, hidden=256, out=2):
    """Deterministic init mimicking PyTorch nn.Linear default
    (uniform(-1/sqrt(fan_in), 1/sqrt(fan_in)))."""
    k1, k2, k3, k4 = jax.random.split(key, 4)
    bound1 = 1.0 / jnp.sqrt(in_channel)
    bound2 = 1.0 / jnp.sqrt(hidden)
    # Stored as (in, out) = PyTorch weight transposed.
    w1 = jax.random.uniform(k1, (in_channel, hidden), jnp.float32,
                            minval=-bound1, maxval=bound1)
    b1 = jax.random.uniform(k2, (1, hidden), jnp.float32,
                            minval=-bound1, maxval=bound1)
    w2 = jax.random.uniform(k3, (hidden, out), jnp.float32,
                            minval=-bound2, maxval=bound2)
    b2 = jax.random.uniform(k4, (1, out), jnp.float32,
                            minval=-bound2, maxval=bound2)
    return w1, b1, w2, b2


def ref_forward_bf16(x, w1, b1, w2, b2):
    """Pure-JAX reference using the same bf16-operand / f32-accum math."""
    h = jnp.dot(x.astype(jnp.bfloat16), w1.astype(jnp.bfloat16),
                preferred_element_type=jnp.float32) + b1
    h = jnp.maximum(h, 0.0)
    return jnp.dot(h.astype(jnp.bfloat16), w2.astype(jnp.bfloat16),
                   preferred_element_type=jnp.float32) + b2


if __name__ == "__main__":
    key = jax.random.PRNGKey(0)
    kx, kp = jax.random.split(key)

    C_in, H, C_out = 768, 256, 2
    w1, b1, w2, b2 = init_params(kp, in_channel=C_in, hidden=H, out=C_out)
    params = prepare_params(w1, b1, w2, b2)   # hoisted, reused across calls

    # Case 1: small batch, not a multiple of 8 (exercises wrapper-side padding,
    # single-step grid, auto tile selection).
    B1 = 20
    x1 = jax.random.normal(kx, (B1, C_in), jnp.float32)
    out1 = jax.block_until_ready(two_layer_forward(x1, params))
    assert out1.shape == (B1, C_out)
    ref1 = ref_forward_bf16(x1, w1, b1, w2, b2)
    assert jnp.allclose(out1, ref1, atol=2e-3, rtol=2e-3)
    ref1_f32 = jnp.maximum(x1 @ w1 + b1, 0.0) @ w2 + b2
    assert jnp.allclose(out1, ref1_f32, atol=3e-2, rtol=3e-2)

    # Case 2: multi-step grid (explicit small tile) to exercise the pipelined /
    # megacore path with reused prepared params.
    B2 = 40
    x2 = jax.random.normal(jax.random.fold_in(kx, 1), (B2, C_in), jnp.float32)
    out2 = jax.block_until_ready(two_layer_forward(x2, params, tm=8))
    assert out2.shape == (B2, C_out)
    ref2 = ref_forward_bf16(x2, w1, b1, w2, b2)
    assert jnp.allclose(out2, ref2, atol=2e-3, rtol=2e-3)

    # Case 3: one-shot convenience wrapper (prepare + forward in one call).
    out3 = jax.block_until_ready(two_layer_classifier(x1, w1, b1, w2, b2))
    assert jnp.allclose(out3, out1, atol=1e-6, rtol=1e-6)

    print("KERNEL_OK")
</pallas_src>

<mosaic_0001>
module attributes {stable_mosaic.version = 11 : i64} {
  func.func @mlp_kernel(%arg0: i32, %arg1: memref<24x768xf32, #tpu.memory_space<vmem>>, %arg2: memref<768x256xbf16, #tpu.memory_space<vmem>>, %arg3: memref<1x256xf32, #tpu.memory_space<vmem>>, %arg4: memref<256x128xbf16, #tpu.memory_space<vmem>>, %arg5: memref<1x128xf32, #tpu.memory_space<vmem>>, %arg6: memref<24x128xf32, #tpu.memory_space<vmem>>) attributes {dimension_semantics = [#tpu.dimension_semantics<parallel>], iteration_bounds = array<i64: 1>, scalar_prefetch = 0 : i64, scratch_operands = 0 : i64, tpu.core_type = #tpu.core_type<tc>, window_params = [{transform_indices = @transform_0, window_bounds = array<i64: 24, 768>}, {pipeline_mode = #tpu.pipeline_mode<synchronous>, transform_indices = @transform_1, window_bounds = array<i64: 768, 256>}, {pipeline_mode = #tpu.pipeline_mode<synchronous>, transform_indices = @transform_2, window_bounds = array<i64: 1, 256>}, {pipeline_mode = #tpu.pipeline_mode<synchronous>, transform_indices = @transform_3, window_bounds = array<i64: 256, 128>}, {pipeline_mode = #tpu.pipeline_mode<synchronous>, transform_indices = @transform_4, window_bounds = array<i64: 1, 128>}, {transform_indices = @transform_5, window_bounds = array<i64: 24, 128>}]} {
    %c0 = arith.constant 0 : index
    %c0_0 = arith.constant 0 : index
    %0 = vector.load %arg1[%c0, %c0_0] : memref<24x768xf32, #tpu.memory_space<vmem>>, vector<24x768xf32>
    %1 = arith.truncf %0 : vector<24x768xf32> to vector<24x768xbf16>
    %c0_1 = arith.constant 0 : index
    %c0_2 = arith.constant 0 : index
    %2 = vector.load %arg2[%c0_1, %c0_2] : memref<768x256xbf16, #tpu.memory_space<vmem>>, vector<768x256xbf16>
    %cst = arith.constant dense<0.000000e+00> : vector<24x256xf32>
    %3 = tpu.matmul %1, %2, %cst {dimension_numbers = #tpu.dot_dimension_numbers<[1], [0], [0], [1], [0, 0, 1, 1], [], []>} : vector<24x768xbf16>, vector<768x256xbf16>, vector<24x256xf32> -> vector<24x256xf32>
    %c0_3 = arith.constant 0 : index
    %c0_4 = arith.constant 0 : index
    %4 = vector.load %arg3[%c0_3, %c0_4] : memref<1x256xf32, #tpu.memory_space<vmem>>, vector<1x256xf32>
    %5 = vector.broadcast %4 : vector<1x256xf32> to vector<24x256xf32>
    %6 = arith.addf %3, %5 : vector<24x256xf32>
    %cst_5 = arith.constant 0.000000e+00 : f32
    %7 = vector.broadcast %cst_5 : f32 to vector<24x256xf32>
    %8 = arith.maximumf %6, %7 : vector<24x256xf32>
    %9 = arith.truncf %8 : vector<24x256xf32> to vector<24x256xbf16>
    %c0_6 = arith.constant 0 : index
    %c0_7 = arith.constant 0 : index
    %10 = vector.load %arg4[%c0_6, %c0_7] : memref<256x128xbf16, #tpu.memory_space<vmem>>, vector<256x128xbf16>
    %cst_8 = arith.constant dense<0.000000e+00> : vector<24x128xf32>
    %11 = tpu.matmul %9, %10, %cst_8 {dimension_numbers = #tpu.dot_dimension_numbers<[1], [0], [0], [1], [0, 0, 1, 1], [], []>} : vector<24x256xbf16>, vector<256x128xbf16>, vector<24x128xf32> -> vector<24x128xf32>
    %c0_9 = arith.constant 0 : index
    %c0_10 = arith.constant 0 : index
    %12 = vector.load %arg5[%c0_9, %c0_10] : memref<1x128xf32, #tpu.memory_space<vmem>>, vector<1x128xf32>
    %13 = vector.broadcast %12 : vector<1x128xf32> to vector<24x128xf32>
    %14 = arith.addf %11, %13 : vector<24x128xf32>
    %c0_11 = arith.constant 0 : index
    %c0_12 = arith.constant 0 : index
    %15 = vector.load %arg6[%c0_11, %c0_12] : memref<24x128xf32, #tpu.memory_space<vmem>>, vector<24x128xf32>
    tpu.vector_store %arg6[%c0_11, %c0_12], %14 {strides = array<i32>} : memref<24x128xf32, #tpu.memory_space<vmem>>, vector<24x128xf32>,
    return
  }
  func.func @transform_0(%arg0: i32) -> (i32, i32) {
    %c0_i32 = arith.constant 0 : i32
    %c0_i32_0 = arith.constant 0 : i32
    return %arg0, %c0_i32 : i32, i32
  }
  func.func @transform_1(%arg0: i32) -> (i32, i32) {
    %c0_i32 = arith.constant 0 : i32
    %c0_i32_0 = arith.constant 0 : i32
    %c0_i32_1 = arith.constant 0 : i32
    return %c0_i32, %c0_i32_0 : i32, i32
  }
  func.func @transform_2(%arg0: i32) -> (i32, i32) {
    %c0_i32 = arith.constant 0 : i32
    %c0_i32_0 = arith.constant 0 : i32
    %c0_i32_1 = arith.constant 0 : i32
    return %c0_i32, %c0_i32_0 : i32, i32
  }
  func.func @transform_3(%arg0: i32) -> (i32, i32) {
    %c0_i32 = arith.constant 0 : i32
    %c0_i32_0 = arith.constant 0 : i32
    %c0_i32_1 = arith.constant 0 : i32
    return %c0_i32, %c0_i32_0 : i32, i32
  }
  func.func @transform_4(%arg0: i32) -> (i32, i32) {
    %c0_i32 = arith.constant 0 : i32
    %c0_i32_0 = arith.constant 0 : i32
    %c0_i32_1 = arith.constant 0 : i32
    return %c0_i32, %c0_i32_0 : i32, i32
  }
  func.func @transform_5(%arg0: i32) -> (i32, i32) {
    %c0_i32 = arith.constant 0 : i32
    %c0_i32_0 = arith.constant 0 : i32
    return %arg0, %c0_i32 : i32, i32
  }
}

</mosaic_0001>

<llo_original>
// kernel: tpu_custom_call.1
$region0: #{tpu_custom_call.1}
  #allocation0 [shape = 'u32[]', space=smem, size = 0x4, offset = 0x4, fixed_abs, tag = 'smem constant byte address 0x4 - core index']
  #allocation1 [shape = 'u32[144,128]{1,0:T(1,128)}', space=vmem, size = 0x12000, scoped, tag = 'internal scratch']
  %s0 = inlined_call_operand.hbm [shape: f32[24,768], index: 0, kind: input, shape index: {}]
  %s1 = inlined_call_operand.hbm [shape: bf16[768,256], index: 1, kind: input, shape index: {}]
  %s2 = inlined_call_operand.vmem [shape: f32[1,256], index: 2, kind: input, shape index: {}]
  %s3 = inlined_call_operand.hbm [shape: bf16[256,128], index: 3, kind: input, shape index: {}]
  %s4 = inlined_call_operand.vmem [shape: f32[1,128], index: 4, kind: input, shape index: {}]
  %s5 = inlined_call_operand.hbm [shape: f32[24,128], index: 5, kind: output, shape index: {}]
  %s6 = sld [smem:[#allocation0]]
  $region42: #{tpu_custom_call.1} parent=0
    _
  %s8 = ssub.s32 1, %s6
  %s9 = scalar_select 0, %s8, %s6
  $region1: #{tpu_custom_call.1} parent=0
    #allocation2 [shape = 'u8[73728]{0}', space=vmem, size = 0x12000, scoped, tag = 'input window, operand 0, single buffered']
    #allocation3 [shape = 's32[1]{0}', space=sflag, size = 0x4, scoped, tag = 'scoped memory for tpu_custom_call.1']
    #allocation4 [shape = 's32[1]{0}', space=sflag, size = 0x4, scoped, tag = 'scoped memory for tpu_custom_call.1']
    #allocation5 [shape = 'u8[393216]{0}', space=vmem, size = 0x60000, scoped, tag = 'input window, operand 1, single buffered']
    #allocation6 [shape = 's32[1]{0}', space=sflag, size = 0x4, scoped, tag = 'scoped memory for tpu_custom_call.1']
    #allocation7 [shape = 'u8[65536]{0}', space=vmem, size = 0x10000, scoped, tag = 'input window, operand 3, single buffered']
    #allocation8 [shape = 'u8[12288]{0}', space=vmem, size = 0x3000, scoped, tag = 'output window, operand 0, single buffered']
    %10 = vsyncpa [#allocation3], 0
    %11 = vsyncpa [#allocation6], 0
    %12 = vsyncpa [#allocation4], 0
    // Predicated region
    $region2: #{tpu_custom_call.1} parent=1 // pred_check
      _
    $region3: #{tpu_custom_call.1} parent=1 // pred_check_branch
      %14 = sbr.rel (0) target = $region5
    $region4: #{tpu_custom_call.1} parent=1 // pred_region
      %s16 = ssub.s32 2304, 2304
      %17 = vsyncadd [#allocation3], %s16
      %s18 = sshll.u32 [#allocation2], 4
      %s19 = int_to_ptr.vmem [resolvable:$true] %s18
      %24 = dma.hbm_to_vmem [thread:$0]  %s0, 2304, %s19, [#allocation3], 768, 768, 48
    $region5: #{tpu_custom_call.1} parent=1 // pred_fallthru
      _
    // Predicated region
    $region6: #{tpu_custom_call.1} parent=1 // pred_check
      _
    $region7: #{tpu_custom_call.1} parent=1 // pred_check_branch
      %26 = sbr.rel (0) target = $region9
    $region8: #{tpu_custom_call.1} parent=1 // pred_region
      %s28 = ssub.s32 12288, 12288
      %29 = vsyncadd [#allocation6], %s28
      %s30 = sshll.u32 [#allocation5], 4
      %s31 = int_to_ptr.vmem [resolvable:$true] %s30
      %36 = dma.hbm_to_vmem [thread:$0]  %s1, 12288, %s31, [#allocation6], 128, 128, 8
    $region9: #{tpu_custom_call.1} parent=1 // pred_fallthru
      _
    // Predicated region
    $region10: #{tpu_custom_call.1} parent=1 // pred_check
      _
    $region11: #{tpu_custom_call.1} parent=1 // pred_check_branch
      %38 = sbr.rel (0) target = $region13
    $region12: #{tpu_custom_call.1} parent=1 // pred_region
      _
    $region13: #{tpu_custom_call.1} parent=1 // pred_fallthru
      _
    // Predicated region
    $region14: #{tpu_custom_call.1} parent=1 // pred_check
      _
    $region15: #{tpu_custom_call.1} parent=1 // pred_check_branch
      %40 = sbr.rel (0) target = $region17
    $region16: #{tpu_custom_call.1} parent=1 // pred_region
      %s42 = ssub.s32 2048, 2048
      %43 = vsyncadd [#allocation6], %s42
      %s44 = sshll.u32 [#allocation7], 4
      %s45 = int_to_ptr.vmem [resolvable:$true] %s44
      %50 = dma.hbm_to_vmem [thread:$0]  %s3, 2048, %s45, [#allocation6], 64, 64, 4
    $region17: #{tpu_custom_call.1} parent=1 // pred_fallthru
      _
    // Predicated region
    $region18: #{tpu_custom_call.1} parent=1 // pred_check
      _
    $region19: #{tpu_custom_call.1} parent=1 // pred_check_branch
      %52 = sbr.rel (0) target = $region21
    $region20: #{tpu_custom_call.1} parent=1 // pred_region
      _
    $region21: #{tpu_custom_call.1} parent=1 // pred_fallthru
      _
    // Predicated region
    $region22: #{tpu_custom_call.1} parent=1 // pred_check
      _
    $region23: #{tpu_custom_call.1} parent=1 // pred_check_branch
      %54 = sbr.rel (0) target = $region25
    $region24: #{tpu_custom_call.1} parent=1 // pred_region
      %55 = dma.done [#allocation3], 2304
    $region25: #{tpu_custom_call.1} parent=1 // pred_fallthru
      _
    // Predicated region
    $region26: #{tpu_custom_call.1} parent=1 // pred_check
      _
    $region27: #{tpu_custom_call.1} parent=1 // pred_check_branch
      %57 = sbr.rel (0) target = $region29
    $region28: #{tpu_custom_call.1} parent=1 // pred_region
      %58 = dma.done [#allocation6], 12288
    $region29: #{tpu_custom_call.1} parent=1 // pred_fallthru
      _
    // Predicated region
    $region30: #{tpu_custom_call.1} parent=1 // pred_check
      _
    $region31: #{tpu_custom_call.1} parent=1 // pred_check_branch
      %60 = sbr.rel (0) target = $region33
    $region32: #{tpu_custom_call.1} parent=1 // pred_region
      %61 = dma.done [#allocation6], 2048
    $region33: #{tpu_custom_call.1} parent=1 // pred_fallthru
      _
    %v63 = vld [vmem:[#allocation2] sm:$0xff]
    %v64 = vld [vmem:[#allocation2 + $0x8] sm:$0xff]
    %v65 = vld [vmem:[#allocation2 + $0x10] sm:$0xff]
    %v66 = vld [vmem:[#allocation2 + $0x18] sm:$0xff]
    %v67 = vld [vmem:[#allocation2 + $0x20] sm:$0xff]
    %v68 = vld [vmem:[#allocation2 + $0x28] sm:$0xff]
    %v69 = vld [vmem:[#allocation2 + $0x30] sm:$0xff]
    %v70 = vld [vmem:[#allocation2 + $0x38] sm:$0xff]
    %v71 = vld [vmem:[#allocation2 + $0x40] sm:$0xff]
    %v72 = vld [vmem:[#allocation2 + $0x48] sm:$0xff]
    %v73 = vld [vmem:[#allocation2 + $0x50] sm:$0xff]
    %v74 = vld [vmem:[#allocation2 + $0x58] sm:$0xff]
    %v75 = vld [vmem:[#allocation2 + $0x60] sm:$0xff]
    %v76 = vld [vmem:[#allocation2 + $0x68] sm:$0xff]
    %v77 = vld [vmem:[#allocation2 + $0x70] sm:$0xff]
    %v78 = vld [vmem:[#allocation2 + $0x78] sm:$0xff]
    %v79 = vld [vmem:[#allocation2 + $0x80] sm:$0xff]
    %v80 = vld [vmem:[#allocation2 + $0x88] sm:$0xff]
    %v81 = vpack.c.bf16 %v69, %v63
    %v82 = vpack.c.bf16 %v70, %v64
    %v83 = vpack.c.bf16 %v71, %v65
    %v84 = vpack.c.bf16 %v72, %v66
    %v85 = vpack.c.bf16 %v73, %v67
    %v86 = vpack.c.bf16 %v74, %v68
    %v87 = vpack.c.bf16 %v75, %v75
    %v88 = vpack.c.bf16 %v76, %v76
    %v89 = vpack.c.bf16 %v77, %v77
    %v90 = vpack.c.bf16 %v78, %v78
    %v91 = vpack.c.bf16 %v79, %v79
    %v92 = vpack.c.bf16 %v80, %v80
    %v93 = vld [vmem:[#allocation5] sm:$0xff]
    %v94 = vld [vmem:[#allocation5 + $0x8] sm:$0xff]
    %v95 = vld [vmem:[#allocation5 + $0x10] sm:$0xff]
    %v96 = vld [vmem:[#allocation5 + $0x18] sm:$0xff]
    %v97 = vld [vmem:[#allocation5 + $0x20] sm:$0xff]
    %v98 = vld [vmem:[#allocation5 + $0x28] sm:$0xff]
    %v99 = vld [vmem:[#allocation5 + $0x30] sm:$0xff]
    %v100 = vld [vmem:[#allocation5 + $0x38] sm:$0xff]
    %v101 = vld [vmem:[#allocation5 + $0x40] sm:$0xff]
    %v102 = vld [vmem:[#allocation5 + $0x48] sm:$0xff]
    %v103 = vld [vmem:[#allocation5 + $0x50] sm:$0xff]
    %v104 = vld [vmem:[#allocation5 + $0x58] sm:$0xff]
    %v105 = vld [vmem:[#allocation5 + $0x60] sm:$0xff]
    %v106 = vld [vmem:[#allocation5 + $0x68] sm:$0xff]
    %v107 = vld [vmem:[#allocation5 + $0x70] sm:$0xff]
    %v108 = vld [vmem:[#allocation5 + $0x78] sm:$0xff]
    %v109 = vld [vmem:[#allocation5 + $0x80] sm:$0xff]
    %v110 = vld [vmem:[#allocation5 + $0x88] sm:$0xff]
    %v111 = vld [vmem:[#allocation5 + $0x90] sm:$0xff]
    %v112 = vld [vmem:[#allocation5 + $0x98] sm:$0xff]
    %v113 = vld [vmem:[#allocation5 + $0xa0] sm:$0xff]
    %v114 = vld [vmem:[#allocation5 + $0xa8] sm:$0xff]
    %v115 = vld [vmem:[#allocation5 + $0xb0] sm:$0xff]
    %v116 = vld [vmem:[#allocation5 + $0xb8] sm:$0xff]
    %v117 = vld [vmem:[#allocation5 + $0xc0] sm:$0xff]
    %v118 = vld [vmem:[#allocation5 + $0xc8] sm:$0xff]
    %v119 = vld [vmem:[#allocation5 + $0xd0] sm:$0xff]
    %v120 = vld [vmem:[#allocation5 + $0xd8] sm:$0xff]
    %v121 = vld [vmem:[#allocation5 + $0xe0] sm:$0xff]
    %v122 = vld [vmem:[#allocation5 + $0xe8] sm:$0xff]
    %v123 = vld [vmem:[#allocation5 + $0xf0] sm:$0xff]
    %v124 = vld [vmem:[#allocation5 + $0xf8] sm:$0xff]
    %v125 = vld [vmem:[#allocation5 + $0x100] sm:$0xff]
    %v126 = vld [vmem:[#allocation5 + $0x108] sm:$0xff]
    %v127 = vld [vmem:[#allocation5 + $0x110] sm:$0xff]
    %v128 = vld [vmem:[#allocation5 + $0x118] sm:$0xff]
    %v129 = vld [vmem:[#allocation5 + $0x120] sm:$0xff]
    %v130 = vld [vmem:[#allocation5 + $0x128] sm:$0xff]
    %v131 = vld [vmem:[#allocation5 + $0x130] sm:$0xff]
    %v132 = vld [vmem:[#allocation5 + $0x138] sm:$0xff]
    %v133 = vld [vmem:[#allocation5 + $0x140] sm:$0xff]
    %v134 = vld [vmem:[#allocation5 + $0x148] sm:$0xff]
    %v135 = vld [vmem:[#allocation5 + $0x150] sm:$0xff]
    %v136 = vld [vmem:[#allocation5 + $0x158] sm:$0xff]
    %v137 = vld [vmem:[#allocation5 + $0x160] sm:$0xff]
    %v138 = vld [vmem:[#allocation5 + $0x168] sm:$0xff]
    %v139 = vld [vmem:[#allocation5 + $0x170] sm:$0xff]
    %v140 = vld [vmem:[#allocation5 + $0x178] sm:$0xff]
    %v141 = vld [vmem:[#allocation5 + $0x180] sm:$0xff]
    %v142 = vld [vmem:[#allocation5 + $0x188] sm:$0xff]
    %v143 = vld [vmem:[#allocation5 + $0x190] sm:$0xff]
    %v144 = vld [vmem:[#allocation5 + $0x198] sm:$0xff]
    %v145 = vld [vmem:[#allocation5 + $0x1a0] sm:$0xff]
    %v146 = vld [vmem:[#allocation5 + $0x1a8] sm:$0xff]
    %v147 = vld [vmem:[#allocation5 + $0x1b0] sm:$0xff]
    %v148 = vld [vmem:[#allocation5 + $0x1b8] sm:$0xff]
    %v149 = vld [vmem:[#allocation5 + $0x1c0] sm:$0xff]
    %v150 = vld [vmem:[#allocation5 + $0x1c8] sm:$0xff]
    %v151 = vld [vmem:[#allocation5 + $0x1d0] sm:$0xff]
    %v152 = vld [vmem:[#allocation5 + $0x1d8] sm:$0xff]
    %v153 = vld [vmem:[#allocation5 + $0x1e0] sm:$0xff]
    %v154 = vld [vmem:[#allocation5 + $0x1e8] sm:$0xff]
    %v155 = vld [vmem:[#allocation5 + $0x1f0] sm:$0xff]
    %v156 = vld [vmem:[#allocation5 + $0x1f8] sm:$0xff]
    %v157 = vld [vmem:[#allocation5 + $0x200] sm:$0xff]
    %v158 = vld [vmem:[#allocation5 + $0x208] sm:$0xff]
    %v159 = vld [vmem:[#allocation5 + $0x210] sm:$0xff]
    %v160 = vld [vmem:[#allocation5 + $0x218] sm:$0xff]
    %v161 = vld [vmem:[#allocation5 + $0x220] sm:$0xff]
    %v162 = vld [vmem:[#allocation5 + $0x228] sm:$0xff]
    %v163 = vld [vmem:[#allocation5 + $0x230] sm:$0xff]
    %v164 = vld [vmem:[#allocation5 + $0x238] sm:$0xff]
    %v165 = vld [vmem:[#allocation5 + $0x240] sm:$0xff]
    %v166 = vld [vmem:[#allocation5 + $0x248] sm:$0xff]
    %v167 = vld [vmem:[#allocation5 + $0x250] sm:$0xff]
    %v168 = vld [vmem:[#allocation5 + $0x258] sm:$0xff]
    %v169 = vld [vmem:[#allocation5 + $0x260] sm:$0xff]
    %v170 = vld [vmem:[#allocation5 + $0x268] sm:$0xff]
    %v171 = vld [vmem:[#allocation5 + $0x270] sm:$0xff]
    %v172 = vld [vmem:[#allocation5 + $0x278] sm:$0xff]
    %v173 = vld [vmem:[#allocation5 + $0x280] sm:$0xff]
    %v174 = vld [vmem:[#allocation5 + $0x288] sm:$0xff]
    %v175 = vld [vmem:[#allocation5 + $0x290] sm:$0xff]
    %v176 = vld [vmem:[#allocation5 + $0x298] sm:$0xff]
    %v177 = vld [vmem:[#allocation5 + $0x2a0] sm:$0xff]
    %v178 = vld [vmem:[#allocation5 + $0x2a8] sm:$0xff]
    %v179 = vld [vmem:[#allocation5 + $0x2b0] sm:$0xff]
    %v180 = vld [vmem:[#allocation5 + $0x2b8] sm:$0xff]
    %v181 = vld [vmem:[#allocation5 + $0x2c0] sm:$0xff]
    %v182 = vld [vmem:[#allocation5 + $0x2c8] sm:$0xff]
    %v183 = vld [vmem:[#allocation5 + $0x2d0] sm:$0xff]
    %v184 = vld [vmem:[#allocation5 + $0x2d8] sm:$0xff]
    %v185 = vld [vmem:[#allocation5 + $0x2e0] sm:$0xff]
    %v186 = vld [vmem:[#allocation5 + $0x2e8] sm:$0xff]
    %v187 = vld [vmem:[#allocation5 + $0x2f0] sm:$0xff]
    %v188 = vld [vmem:[#allocation5 + $0x2f8] sm:$0xff]
    %v189 = vld [vmem:[%s2] sm:$0x3]
    %v191 = vlaneseq
    %v192 = vshrl.u32 %v191, 7
    %v193 = vsub.s32 0, %v192
    %v194 = vrot.slane %v189, %v193
    %v195 = vlaneseq
    %v196 = vshrl.u32 %v195, 7
    %v197 = vsub.s32 1, %v196
    %v198 = vrot.slane %v189, %v197
    %v297 = vunpack.c.l.b16 %v93
    %v298 = vunpack.c.h.b16 %v93
    %v299 = vunpack.c.l.b16 %v94
    %v300 = vunpack.c.h.b16 %v94
    %v301 = vunpack.c.l.b16 %v95
    %v302 = vunpack.c.h.b16 %v95
    %v303 = vunpack.c.l.b16 %v96
    %v304 = vunpack.c.h.b16 %v96
    %v305 = vunpack.c.l.b16 %v97
    %v306 = vunpack.c.h.b16 %v97
    %v307 = vunpack.c.l.b16 %v98
    %v308 = vunpack.c.h.b16 %v98
    %v309 = vunpack.c.l.b16 %v99
    %v310 = vunpack.c.h.b16 %v99
    %v311 = vunpack.c.l.b16 %v100
    %v312 = vunpack.c.h.b16 %v100
    %v313 = vunpack.c.l.b16 %v101
    %v314 = vunpack.c.h.b16 %v101
    %v315 = vunpack.c.l.b16 %v102
    %v316 = vunpack.c.h.b16 %v102
    %v317 = vunpack.c.l.b16 %v103
    %v318 = vunpack.c.h.b16 %v103
    %v319 = vunpack.c.l.b16 %v104
    %v320 = vunpack.c.h.b16 %v104
    %v321 = vunpack.c.l.b16 %v105
    %v322 = vunpack.c.h.b16 %v105
    %v323 = vunpack.c.l.b16 %v106
    %v324 = vunpack.c.h.b16 %v106
    %v325 = vunpack.c.l.b16 %v107
    %v326 = vunpack.c.h.b16 %v107
    %v327 = vunpack.c.l.b16 %v108
    %v328 = vunpack.c.h.b16 %v108
    %v329 = vunpack.c.l.b16 %v109
    %v330 = vunpack.c.h.b16 %v109
    %v331 = vunpack.c.l.b16 %v110
    %v332 = vunpack.c.h.b16 %v110
    %v333 = vunpack.c.l.b16 %v111
    %v334 = vunpack.c.h.b16 %v111
    %v335 = vunpack.c.l.b16 %v112
    %v336 = vunpack.c.h.b16 %v112
    %v337 = vunpack.c.l.b16 %v113
    %v338 = vunpack.c.h.b16 %v113
    %v339 = vunpack.c.l.b16 %v114
    %v340 = vunpack.c.h.b16 %v114
    %v341 = vunpack.c.l.b16 %v115
    %v342 = vunpack.c.h.b16 %v115
    %v343 = vunpack.c.l.b16 %v116
    %v344 = vunpack.c.h.b16 %v116
    %v345 = vunpack.c.l.b16 %v117
    %v346 = vunpack.c.h.b16 %v117
    %v347 = vunpack.c.l.b16 %v118
    %v348 = vunpack.c.h.b16 %v118
    %v349 = vunpack.c.l.b16 %v119
    %v350 = vunpack.c.h.b16 %v119
    %v351 = vunpack.c.l.b16 %v120
    %v352 = vunpack.c.h.b16 %v120
    %v353 = vunpack.c.l.b16 %v121
    %v354 = vunpack.c.h.b16 %v121
    %v355 = vunpack.c.l.b16 %v122
    %v356 = vunpack.c.h.b16 %v122
    %v357 = vunpack.c.l.b16 %v123
    %v358 = vunpack.c.h.b16 %v123
    %v359 = vunpack.c.l.b16 %v124
    %v360 = vunpack.c.h.b16 %v124
    %v361 = vunpack.c.l.b16 %v125
    %v362 = vunpack.c.h.b16 %v125
    %v363 = vunpack.c.l.b16 %v126
    %v364 = vunpack.c.h.b16 %v126
    %v365 = vunpack.c.l.b16 %v127
    %v366 = vunpack.c.h.b16 %v127
    %v367 = vunpack.c.l.b16 %v128
    %v368 = vunpack.c.h.b16 %v128
    %v369 = vunpack.c.l.b16 %v129
    %v370 = vunpack.c.h.b16 %v129
    %v371 = vunpack.c.l.b16 %v130
    %v372 = vunpack.c.h.b16 %v130
    %v373 = vunpack.c.l.b16 %v131
    %v374 = vunpack.c.h.b16 %v131
    %v375 = vunpack.c.l.b16 %v132
    %v376 = vunpack.c.h.b16 %v132
    %v377 = vunpack.c.l.b16 %v133
    %v378 = vunpack.c.h.b16 %v133
    %v379 = vunpack.c.l.b16 %v134
    %v380 = vunpack.c.h.b16 %v134
    %v381 = vunpack.c.l.b16 %v135
    %v382 = vunpack.c.h.b16 %v135
    %v383 = vunpack.c.l.b16 %v136
    %v384 = vunpack.c.h.b16 %v136
    %v385 = vunpack.c.l.b16 %v137
    %v386 = vunpack.c.h.b16 %v137
    %v387 = vunpack.c.l.b16 %v138
    %v388 = vunpack.c.h.b16 %v138
    %v389 = vunpack.c.l.b16 %v139
    %v390 = vunpack.c.h.b16 %v139
    %v391 = vunpack.c.l.b16 %v140
    %v392 = vunpack.c.h.b16 %v140
    %v393 = vunpack.c.l.b16 %v141
    %v394 = vunpack.c.h.b16 %v141
    %v395 = vunpack.c.l.b16 %v142
    %v396 = vunpack.c.h.b16 %v142
    %v397 = vunpack.c.l.b16 %v143
    %v398 = vunpack.c.h.b16 %v143
    %v399 = vunpack.c.l.b16 %v144
    %v400 = vunpack.c.h.b16 %v144
    %v401 = vunpack.c.l.b16 %v145
    %v402 = vunpack.c.h.b16 %v145
    %v403 = vunpack.c.l.b16 %v146
    %v404 = vunpack.c.h.b16 %v146
    %v405 = vunpack.c.l.b16 %v147
    %v406 = vunpack.c.h.b16 %v147
    %v407 = vunpack.c.l.b16 %v148
    %v408 = vunpack.c.h.b16 %v148
    %v409 = vunpack.c.l.b16 %v149
    %v410 = vunpack.c.h.b16 %v149
    %v411 = vunpack.c.l.b16 %v150
    %v412 = vunpack.c.h.b16 %v150
    %v413 = vunpack.c.l.b16 %v151
    %v414 = vunpack.c.h.b16 %v151
    %v415 = vunpack.c.l.b16 %v152
    %v416 = vunpack.c.h.b16 %v152
    %v417 = vunpack.c.l.b16 %v153
    %v418 = vunpack.c.h.b16 %v153
    %v419 = vunpack.c.l.b16 %v154
    %v420 = vunpack.c.h.b16 %v154
    %v421 = vunpack.c.l.b16 %v155
    %v422 = vunpack.c.h.b16 %v155
    %v423 = vunpack.c.l.b16 %v156
    %v424 = vunpack.c.h.b16 %v156
    %v425 = vunpack.c.l.b16 %v157
    %v426 = vunpack.c.h.b16 %v157
    %v427 = vunpack.c.l.b16 %v158
    %v428 = vunpack.c.h.b16 %v158
    %v429 = vunpack.c.l.b16 %v159
    %v430 = vunpack.c.h.b16 %v159
    %v431 = vunpack.c.l.b16 %v160
    %v432 = vunpack.c.h.b16 %v160
    %v433 = vunpack.c.l.b16 %v161
    %v434 = vunpack.c.h.b16 %v161
    %v435 = vunpack.c.l.b16 %v162
    %v436 = vunpack.c.h.b16 %v162
    %v437 = vunpack.c.l.b16 %v163
    %v438 = vunpack.c.h.b16 %v163
    %v439 = vunpack.c.l.b16 %v164
    %v440 = vunpack.c.h.b16 %v164
    %v441 = vunpack.c.l.b16 %v165
    %v442 = vunpack.c.h.b16 %v165
    %v443 = vunpack.c.l.b16 %v166
    %v444 = vunpack.c.h.b16 %v166
    %v445 = vunpack.c.l.b16 %v167
    %v446 = vunpack.c.h.b16 %v167
    %v447 = vunpack.c.l.b16 %v168
    %v448 = vunpack.c.h.b16 %v168
    %v449 = vunpack.c.l.b16 %v169
    %v450 = vunpack.c.h.b16 %v169
    %v451 = vunpack.c.l.b16 %v170
    %v452 = vunpack.c.h.b16 %v170
    %v453 = vunpack.c.l.b16 %v171
    %v454 = vunpack.c.h.b16 %v171
    %v455 = vunpack.c.l.b16 %v172
    %v456 = vunpack.c.h.b16 %v172
    %v457 = vunpack.c.l.b16 %v173
    %v458 = vunpack.c.h.b16 %v173
    %v459 = vunpack.c.l.b16 %v174
    %v460 = vunpack.c.h.b16 %v174
    %v461 = vunpack.c.l.b16 %v175
    %v462 = vunpack.c.h.b16 %v175
    %v463 = vunpack.c.l.b16 %v176
    %v464 = vunpack.c.h.b16 %v176
    %v465 = vunpack.c.l.b16 %v177
    %v466 = vunpack.c.h.b16 %v177
    %v467 = vunpack.c.l.b16 %v178
    %v468 = vunpack.c.h.b16 %v178
    %v469 = vunpack.c.l.b16 %v179
    %v470 = vunpack.c.h.b16 %v179
    %v471 = vunpack.c.l.b16 %v180
    %v472 = vunpack.c.h.b16 %v180
    %v473 = vunpack.c.l.b16 %v181
    %v474 = vunpack.c.h.b16 %v181
    %v475 = vunpack.c.l.b16 %v182
    %v476 = vunpack.c.h.b16 %v182
    %v477 = vunpack.c.l.b16 %v183
    %v478 = vunpack.c.h.b16 %v183
    %v479 = vunpack.c.l.b16 %v184
    %v480 = vunpack.c.h.b16 %v184
    %v481 = vunpack.c.l.b16 %v185
    %v482 = vunpack.c.h.b16 %v185
    %v483 = vunpack.c.l.b16 %v186
    %v484 = vunpack.c.h.b16 %v186
    %v485 = vunpack.c.l.b16 %v187
    %v486 = vunpack.c.h.b16 %v187
    %v487 = vunpack.c.l.b16 %v188
    %v488 = vunpack.c.h.b16 %v188
    %v489 = vpack.c.b16 %v299, %v297
    %v490 = vpack.c.b16 %v300, %v298
    %v491 = vpack.c.b16 %v303, %v301
    %v492 = vpack.c.b16 %v304, %v302
    %v493 = vpack.c.b16 %v307, %v305
    %v494 = vpack.c.b16 %v308, %v306
    %v495 = vpack.c.b16 %v311, %v309
    %v496 = vpack.c.b16 %v312, %v310
    %v497 = vpack.c.b16 %v315, %v313
    %v498 = vpack.c.b16 %v316, %v314
    %v499 = vpack.c.b16 %v319, %v317
    %v500 = vpack.c.b16 %v320, %v318
    %v501 = vpack.c.b16 %v323, %v321
    %v502 = vpack.c.b16 %v324, %v322
    %v503 = vpack.c.b16 %v327, %v325
    %v504 = vpack.c.b16 %v328, %v326
    %v505 = vpack.c.b16 %v331, %v329
    %v506 = vpack.c.b16 %v332, %v330
    %v507 = vpack.c.b16 %v335, %v333
    %v508 = vpack.c.b16 %v336, %v334
    %v509 = vpack.c.b16 %v339, %v337
    %v510 = vpack.c.b16 %v340, %v338
    %v511 = vpack.c.b16 %v343, %v341
    %v512 = vpack.c.b16 %v344, %v342
    %v513 = vpack.c.b16 %v347, %v345
    %v514 = vpack.c.b16 %v348, %v346
    %v515 = vpack.c.b16 %v351, %v349
    %v516 = vpack.c.b16 %v352, %v350
    %v517 = vpack.c.b16 %v355, %v353
    %v518 = vpack.c.b16 %v356, %v354
    %v519 = vpack.c.b16 %v359, %v357
    %v520 = vpack.c.b16 %v360, %v358
    %v521 = vpack.c.b16 %v363, %v361
    %v522 = vpack.c.b16 %v364, %v362
    %v523 = vpack.c.b16 %v367, %v365
    %v524 = vpack.c.b16 %v368, %v366
    %v525 = vpack.c.b16 %v371, %v369
    %v526 = vpack.c.b16 %v372, %v370
    %v527 = vpack.c.b16 %v375, %v373
    %v528 = vpack.c.b16 %v376, %v374
    %v529 = vpack.c.b16 %v379, %v377
    %v530 = vpack.c.b16 %v380, %v378
    %v531 = vpack.c.b16 %v383, %v381
    %v532 = vpack.c.b16 %v384, %v382
    %v533 = vpack.c.b16 %v387, %v385
    %v534 = vpack.c.b16 %v388, %v386
    %v535 = vpack.c.b16 %v391, %v389
    %v536 = vpack.c.b16 %v392, %v390
    %v537 = vpack.c.b16 %v395, %v393
    %v538 = vpack.c.b16 %v396, %v394
    %v539 = vpack.c.b16 %v399, %v397
    %v540 = vpack.c.b16 %v400, %v398
    %v541 = vpack.c.b16 %v403, %v401
    %v542 = vpack.c.b16 %v404, %v402
    %v543 = vpack.c.b16 %v407, %v405
    %v544 = vpack.c.b16 %v408, %v406
    %v545 = vpack.c.b16 %v411, %v409
    %v546 = vpack.c.b16 %v412, %v410
    %v547 = vpack.c.b16 %v415, %v413
    %v548 = vpack.c.b16 %v416, %v414
    %v549 = vpack.c.b16 %v419, %v417
    %v550 = vpack.c.b16 %v420, %v418
    %v551 = vpack.c.b16 %v423, %v421
    %v552 = vpack.c.b16 %v424, %v422
    %v553 = vpack.c.b16 %v427, %v425
    %v554 = vpack.c.b16 %v428, %v426
    %v555 = vpack.c.b16 %v431, %v429
    %v556 = vpack.c.b16 %v432, %v430
    %v557 = vpack.c.b16 %v435, %v433
    %v558 = vpack.c.b16 %v436, %v434
    %v559 = vpack.c.b16 %v439, %v437
    %v560 = vpack.c.b16 %v440, %v438
    %v561 = vpack.c.b16 %v443, %v441
    %v562 = vpack.c.b16 %v444, %v442
    %v563 = vpack.c.b16 %v447, %v445
    %v564 = vpack.c.b16 %v448, %v446
    %v565 = vpack.c.b16 %v451, %v449
    %v566 = vpack.c.b16 %v452, %v450
    %v567 = vpack.c.b16 %v455, %v453
    %v568 = vpack.c.b16 %v456, %v454
    %v569 = vpack.c.b16 %v459, %v457
    %v570 = vpack.c.b16 %v460, %v458
    %v571 = vpack.c.b16 %v463, %v461
    %v572 = vpack.c.b16 %v464, %v462
    %v573 = vpack.c.b16 %v467, %v465
    %v574 = vpack.c.b16 %v468, %v466
    %v575 = vpack.c.b16 %v471, %v469
    %v576 = vpack.c.b16 %v472, %v470
    %v577 = vpack.c.b16 %v475, %v473
    %v578 = vpack.c.b16 %v476, %v474
    %v579 = vpack.c.b16 %v479, %v477
    %v580 = vpack.c.b16 %v480, %v478
    %v581 = vpack.c.b16 %v483, %v481
    %v582 = vpack.c.b16 %v484, %v482
    %v583 = vpack.c.b16 %v487, %v485
    %v584 = vpack.c.b16 %v488, %v486
    %681 = vmatprep.subr.bf16.mxu0 %v490
    %682 = vmatpush1.bf16.msra.mxu0 %v489
    %683 = vmatprep.subr.bf16.mxu0 %v492
    %684 = vmatpush1.bf16.msra.mxu0 %v491
    %685 = vmatprep.subr.bf16.mxu0 %v494
    %686 = vmatpush1.bf16.msra.mxu0 %v493
    %687 = vmatprep.subr.bf16.mxu0 %v496
    %688 = vmatpush1.bf16.msra.mxu0 %v495
    %689 = vmatprep.subr.bf16.mxu0 %v498
    %690 = vmatpush1.bf16.msra.mxu0 %v497
    %691 = vmatprep.subr.bf16.mxu0 %v500
    %692 = vmatpush1.bf16.msra.mxu0 %v499
    %693 = vmatprep.subr.bf16.mxu0 %v502
    %694 = vmatpush1.bf16.msra.mxu0 %v501
    %695 = vmatprep.subr.bf16.mxu0 %v504
    %696 = vmatpush1.bf16.msra.mxu0 %v503
    %697 = vmatprep.subr.bf16.mxu0 %v506
    %698 = vmatpush1.bf16.msra.mxu0 %v505
    %699 = vmatprep.subr.bf16.mxu0 %v508
    %700 = vmatpush1.bf16.msra.mxu0 %v507
    %701 = vmatprep.subr.bf16.mxu0 %v510
    %702 = vmatpush1.bf16.msra.mxu0 %v509
    %703 = vmatprep.subr.bf16.mxu0 %v512
    %704 = vmatpush1.bf16.msra.mxu0 %v511
    %705 = vmatprep.subr.bf16.mxu0 %v514
    %706 = vmatpush1.bf16.msra.mxu0 %v513
    %707 = vmatprep.subr.bf16.mxu0 %v516
    %708 = vmatpush1.bf16.msra.mxu0 %v515
    %709 = vmatprep.subr.bf16.mxu0 %v518
    %710 = vmatpush1.bf16.msra.mxu0 %v517
    %711 = vmatprep.subr.bf16.mxu0 %v520
    %712 = vmatpush1.bf16.msra.mxu0 %v519
    %713 = vmatprep.mubr.bf16.mxu0 %v82
    %714 = vmatmul.mubr.bf16.gmra.mrb[0].mxu0 %v81
    %v715 = vpop.f32.mrb[0].mxu0
    %v716 = vadd.f32 %v194, %v715
    %v717 = vpop.f32.mrb[0].mxu0
    %v718 = vadd.f32 %v198, %v717
    %v719 = vpop.f32.mrb[0].mxu0
    %v720 = vadd.f32 %v194, %v719
    %v721 = vpop.f32.mrb[0].mxu0
    %v722 = vadd.f32 %v198, %v721
    %723 = vmatprep.mubr.bf16.mxu0 %v88
    %724 = vmatmul.mubr.bf16.gmra.mrb[0].mxu0 %v87
    %v725 = vpop.f32.mrb[0].mxu0
    %v726 = vadd.f32 %v194, %v725
    %v727 = vpop.f32.mrb[0].mxu0
    %v728 = vadd.f32 %v198, %v727
    %v729 = vpop.f32.mrb[0].mxu0
    %v730 = vpop.f32.mrb[0].mxu0
    %731 = vdwg.mxu0
    %732 = vmatprep.subr.bf16.mxu0 %v522
    %733 = vmatpush1.bf16.msra.mxu0 %v521
    %734 = vmatprep.subr.bf16.mxu0 %v524
    %735 = vmatpush1.bf16.msra.mxu0 %v523
    %736 = vmatprep.subr.bf16.mxu0 %v526
    %737 = vmatpush1.bf16.msra.mxu0 %v525
    %738 = vmatprep.subr.bf16.mxu0 %v528
    %739 = vmatpush1.bf16.msra.mxu0 %v527
    %740 = vmatprep.subr.bf16.mxu0 %v530
    %741 = vmatpush1.bf16.msra.mxu0 %v529
    %742 = vmatprep.subr.bf16.mxu0 %v532
    %743 = vmatpush1.bf16.msra.mxu0 %v531
    %744 = vmatprep.subr.bf16.mxu0 %v534
    %745 = vmatpush1.bf16.msra.mxu0 %v533
    %746 = vmatprep.subr.bf16.mxu0 %v536
    %747 = vmatpush1.bf16.msra.mxu0 %v535
    %748 = vmatprep.subr.bf16.mxu0 %v538
    %749 = vmatpush1.bf16.msra.mxu0 %v537
    %750 = vmatprep.subr.bf16.mxu0 %v540
    %751 = vmatpush1.bf16.msra.mxu0 %v539
    %752 = vmatprep.subr.bf16.mxu0 %v542
    %753 = vmatpush1.bf16.msra.mxu0 %v541
    %754 = vmatprep.subr.bf16.mxu0 %v544
    %755 = vmatpush1.bf16.msra.mxu0 %v543
    %756 = vmatprep.subr.bf16.mxu0 %v546
    %757 = vmatpush1.bf16.msra.mxu0 %v545
    %758 = vmatprep.subr.bf16.mxu0 %v548
    %759 = vmatpush1.bf16.msra.mxu0 %v547
    %760 = vmatprep.subr.bf16.mxu0 %v550
    %761 = vmatpush1.bf16.msra.mxu0 %v549
    %762 = vmatprep.subr.bf16.mxu0 %v552
    %763 = vmatpush1.bf16.msra.mxu0 %v551
    %764 = vmatprep.mubr.bf16.mxu0 %v84
    %765 = vmatmul.mubr.bf16.gmra.mrb[0].mxu0 %v83
    %v766 = vpop.f32.mrb[0].mxu0
    %v767 = vadd.f32 %v716, %v766
    %v768 = vpop.f32.mrb[0].mxu0
    %v769 = vadd.f32 %v718, %v768
    %v770 = vpop.f32.mrb[0].mxu0
    %v771 = vadd.f32 %v720, %v770
    %v772 = vpop.f32.mrb[0].mxu0
    %v773 = vadd.f32 %v722, %v772
    %774 = vmatprep.mubr.bf16.mxu0 %v90
    %775 = vmatmul.mubr.bf16.gmra.mrb[0].mxu0 %v89
    %v776 = vpop.f32.mrb[0].mxu0
    %v777 = vadd.f32 %v726, %v776
    %v778 = vpop.f32.mrb[0].mxu0
    %v779 = vadd.f32 %v728, %v778
    %v780 = vpop.f32.mrb[0].mxu0
    %v781 = vpop.f32.mrb[0].mxu0
    %782 = vdwg.mxu0
    %783 = vmatprep.subr.bf16.mxu0 %v554
    %784 = vmatpush1.bf16.msra.mxu0 %v553
    %785 = vmatprep.subr.bf16.mxu0 %v556
    %786 = vmatpush1.bf16.msra.mxu0 %v555
    %787 = vmatprep.subr.bf16.mxu0 %v558
    %788 = vmatpush1.bf16.msra.mxu0 %v557
    %789 = vmatprep.subr.bf16.mxu0 %v560
    %790 = vmatpush1.bf16.msra.mxu0 %v559
    %791 = vmatprep.subr.bf16.mxu0 %v562
    %792 = vmatpush1.bf16.msra.mxu0 %v561
    %793 = vmatprep.subr.bf16.mxu0 %v564
    %794 = vmatpush1.bf16.msra.mxu0 %v563
    %795 = vmatprep.subr.bf16.mxu0 %v566
    %796 = vmatpush1.bf16.msra.mxu0 %v565
    %797 = vmatprep.subr.bf16.mxu0 %v568
    %798 = vmatpush1.bf16.msra.mxu0 %v567
    %799 = vmatprep.subr.bf16.mxu0 %v570
    %800 = vmatpush1.bf16.msra.mxu0 %v569
    %801 = vmatprep.subr.bf16.mxu0 %v572
    %802 = vmatpush1.bf16.msra.mxu0 %v571
    %803 = vmatprep.subr.bf16.mxu0 %v574
    %804 = vmatpush1.bf16.msra.mxu0 %v573
    %805 = vmatprep.subr.bf16.mxu0 %v576
    %806 = vmatpush1.bf16.msra.mxu0 %v575
    %807 = vmatprep.subr.bf16.mxu0 %v578
    %808 = vmatpush1.bf16.msra.mxu0 %v577
    %809 = vmatprep.subr.bf16.mxu0 %v580
    %810 = vmatpush1.bf16.msra.mxu0 %v579
    %811 = vmatprep.subr.bf16.mxu0 %v582
    %812 = vmatpush1.bf16.msra.mxu0 %v581
    %813 = vmatprep.subr.bf16.mxu0 %v584
    %814 = vmatpush1.bf16.msra.mxu0 %v583
    %815 = vmatprep.mubr.bf16.mxu0 %v86
    %816 = vmatmul.mubr.bf16.gmra.mrb[0].mxu0 %v85
    %v817 = vpop.f32.mrb[0].mxu0
    %v818 = vadd.f32 %v767, %v817
    %v819 = vpop.f32.mrb[0].mxu0
    %v820 = vadd.f32 %v769, %v819
    %v821 = vpop.f32.mrb[0].mxu0
    %v822 = vadd.f32 %v771, %v821
    %v823 = vpop.f32.mrb[0].mxu0
    %v824 = vadd.f32 %v773, %v823
    %825 = vmatprep.mubr.bf16.mxu0 %v92
    %826 = vmatmul.mubr.bf16.gmra.mrb[0].mxu0 %v91
    %v827 = vpop.f32.mrb[0].mxu0
    %v828 = vadd.f32 %v777, %v827
    %v829 = vpop.f32.mrb[0].mxu0
    %v830 = vadd.f32 %v779, %v829
    %v831 = vpop.f32.mrb[0].mxu0
    %v832 = vpop.f32.mrb[0].mxu0
    %833 = vdwg.mxu0
    %v834 = vmax.f32 %v818, 0.0
    %v835 = vmax.f32 %v820, 0.0
    %v836 = vmax.f32 %v822, 0.0
    %v837 = vmax.f32 %v824, 0.0
    %v838 = vmax.f32 %v828, 0.0
    %v839 = vmax.f32 %v830, 0.0
    %v840 = vpack.c.bf16 %v836, %v834
    %v841 = vpack.c.bf16 %v837, %v835
    %v842 = vpack.c.bf16 %v838, %v838
    %v843 = vpack.c.bf16 %v839, %v839
    %v844 = vld [vmem:[#allocation7] sm:$0xf]
    %v845 = vld [vmem:[#allocation7 + $0x4] sm:$0xf]
    %v846 = vld [vmem:[#allocation7 + $0x8] sm:$0xf]
    %v847 = vld [vmem:[#allocation7 + $0xc] sm:$0xf]
    %v848 = vld [vmem:[#allocation7 + $0x10] sm:$0xf]
    %v849 = vld [vmem:[#allocation7 + $0x14] sm:$0xf]
    %v850 = vld [vmem:[#allocation7 + $0x18] sm:$0xf]
    %v851 = vld [vmem:[#allocation7 + $0x1c] sm:$0xf]
    %v852 = vld [vmem:[#allocation7 + $0x20] sm:$0xf]
    %v853 = vld [vmem:[#allocation7 + $0x24] sm:$0xf]
    %v854 = vld [vmem:[#allocation7 + $0x28] sm:$0xf]
    %v855 = vld [vmem:[#allocation7 + $0x2c] sm:$0xf]
    %v856 = vld [vmem:[#allocation7 + $0x30] sm:$0xf]
    %v857 = vld [vmem:[#allocation7 + $0x34] sm:$0xf]
    %v858 = vld [vmem:[#allocation7 + $0x38] sm:$0xf]
    %v859 = vld [vmem:[#allocation7 + $0x3c] sm:$0xf]
    %v860 = vld [vmem:[#allocation7 + $0x40] sm:$0xf]
    %v861 = vld [vmem:[#allocation7 + $0x44] sm:$0xf]
    %v862 = vld [vmem:[#allocation7 + $0x48] sm:$0xf]
    %v863 = vld [vmem:[#allocation7 + $0x4c] sm:$0xf]
    %v864 = vld [vmem:[#allocation7 + $0x50] sm:$0xf]
    %v865 = vld [vmem:[#allocation7 + $0x54] sm:$0xf]
    %v866 = vld [vmem:[#allocation7 + $0x58] sm:$0xf]
    %v867 = vld [vmem:[#allocation7 + $0x5c] sm:$0xf]
    %v868 = vld [vmem:[#allocation7 + $0x60] sm:$0xf]
    %v869 = vld [vmem:[#allocation7 + $0x64] sm:$0xf]
    %v870 = vld [vmem:[#allocation7 + $0x68] sm:$0xf]
    %v871 = vld [vmem:[#allocation7 + $0x6c] sm:$0xf]
    %v872 = vld [vmem:[#allocation7 + $0x70] sm:$0xf]
    %v873 = vld [vmem:[#allocation7 + $0x74] sm:$0xf]
    %v874 = vld [vmem:[#allocation7 + $0x78] sm:$0xf]
    %v875 = vld [vmem:[#allocation7 + $0x7c] sm:$0xf]
    %v876 = vld [vmem:[%s4] sm:$0x1]
    %v878 = vlaneseq
    %v879 = vshrl.u32 %v878, 7
    %v880 = vsub.s32 0, %v879
    %v881 = vrot.slane %v876, %v880
    %v915 = vunpack.c.l.b16 %v844
    %v916 = vunpack.c.l.b16 %v845
    %v917 = vunpack.c.l.b16 %v846
    %v918 = vunpack.c.l.b16 %v847
    %v919 = vunpack.c.l.b16 %v848
    %v920 = vunpack.c.l.b16 %v849
    %v921 = vunpack.c.l.b16 %v850
    %v922 = vunpack.c.l.b16 %v851
    %v923 = vunpack.c.l.b16 %v852
    %v924 = vunpack.c.l.b16 %v853
    %v925 = vunpack.c.l.b16 %v854
    %v926 = vunpack.c.l.b16 %v855
    %v927 = vunpack.c.l.b16 %v856
    %v928 = vunpack.c.l.b16 %v857
    %v929 = vunpack.c.l.b16 %v858
    %v930 = vunpack.c.l.b16 %v859
    %v931 = vunpack.c.l.b16 %v860
    %v932 = vunpack.c.l.b16 %v861
    %v933 = vunpack.c.l.b16 %v862
    %v934 = vunpack.c.l.b16 %v863
    %v935 = vunpack.c.l.b16 %v864
    %v936 = vunpack.c.l.b16 %v865
    %v937 = vunpack.c.l.b16 %v866
    %v938 = vunpack.c.l.b16 %v867
    %v939 = vunpack.c.l.b16 %v868
    %v940 = vunpack.c.l.b16 %v869
    %v941 = vunpack.c.l.b16 %v870
    %v942 = vunpack.c.l.b16 %v871
    %v943 = vunpack.c.l.b16 %v872
    %v944 = vunpack.c.l.b16 %v873
    %v945 = vunpack.c.l.b16 %v874
    %v946 = vunpack.c.l.b16 %v875
    %v947 = vpack.c.b16 %v916, %v915
    %v948 = vpack.c.b16 %v918, %v917
    %v949 = vpack.c.b16 %v920, %v919
    %v950 = vpack.c.b16 %v922, %v921
    %v951 = vpack.c.b16 %v924, %v923
    %v952 = vpack.c.b16 %v926, %v925
    %v953 = vpack.c.b16 %v928, %v927
    %v954 = vpack.c.b16 %v930, %v929
    %v955 = vpack.c.b16 %v932, %v931
    %v956 = vpack.c.b16 %v934, %v933
    %v957 = vpack.c.b16 %v936, %v935
    %v958 = vpack.c.b16 %v938, %v937
    %v959 = vpack.c.b16 %v940, %v939
    %v960 = vpack.c.b16 %v942, %v941
    %v961 = vpack.c.b16 %v944, %v943
    %v962 = vpack.c.b16 %v946, %v945
    %979 = vmatprep.subr.bf16.mxu0 0
    %980 = vmatpush1.bf16.msra.mxu0 %v947
    %981 = vmatprep.subr.bf16.mxu0 0
    %982 = vmatpush1.bf16.msra.mxu0 %v948
    %983 = vmatprep.subr.bf16.mxu0 0
    %984 = vmatpush1.bf16.msra.mxu0 %v949
    %985 = vmatprep.subr.bf16.mxu0 0
    %986 = vmatpush1.bf16.msra.mxu0 %v950
    %987 = vmatprep.subr.bf16.mxu0 0
    %988 = vmatpush1.bf16.msra.mxu0 %v951
    %989 = vmatprep.subr.bf16.mxu0 0
    %990 = vmatpush1.bf16.msra.mxu0 %v952
    %991 = vmatprep.subr.bf16.mxu0 0
    %992 = vmatpush1.bf16.msra.mxu0 %v953
    %993 = vmatprep.subr.bf16.mxu0 0
    %994 = vmatpush1.bf16.msra.mxu0 %v954
    %995 = vmatprep.subr.bf16.mxu0 0
    %996 = vmatpush1.bf16.msra.mxu0 %v955
    %997 = vmatprep.subr.bf16.mxu0 0
    %998 = vmatpush1.bf16.msra.mxu0 %v956
    %999 = vmatprep.subr.bf16.mxu0 0
    %1000 = vmatpush1.bf16.msra.mxu0 %v957
    %1001 = vmatprep.subr.bf16.mxu0 0
    %1002 = vmatpush1.bf16.msra.mxu0 %v958
    %1003 = vmatprep.subr.bf16.mxu0 0
    %1004 = vmatpush1.bf16.msra.mxu0 %v959
    %1005 = vmatprep.subr.bf16.mxu0 0
    %1006 = vmatpush1.bf16.msra.mxu0 %v960
    %1007 = vmatprep.subr.bf16.mxu0 0
    %1008 = vmatpush1.bf16.msra.mxu0 %v961
    %1009 = vmatprep.subr.bf16.mxu0 0
    %1010 = vmatpush1.bf16.msra.mxu0 %v962
    %1011 = vmatprep.mubr.bf16.mxu0 %v841
    %1012 = vmatmul.mubr.bf16.gmra.mrb[0].mxu0 %v840
    %v1013 = vpop.f32.mrb[0].mxu0
    %v1014 = vadd.f32 %v881, %v1013
    %v1015 = vpop.f32.mrb[0].mxu0
    %v1016 = vpop.f32.mrb[0].mxu0
    %v1017 = vadd.f32 %v881, %v1016
    %v1018 = vpop.f32.mrb[0].mxu0
    %1019 = vmatprep.mubr.bf16.mxu0 %v843
    %1020 = vmatmul.mubr.bf16.gmra.mrb[0].mxu0 %v842
    %v1021 = vpop.f32.mrb[0].mxu0
    %v1022 = vadd.f32 %v881, %v1021
    %v1023 = vpop.f32.mrb[0].mxu0
    %v1024 = vpop.f32.mrb[0].mxu0
    %v1025 = vpop.f32.mrb[0].mxu0
    %1026 = vdwg.mxu0
    %1027 = vst [vmem:[#allocation8] sm:$0xff] %v1014
    %1028 = vst [vmem:[#allocation8 + $0x8] sm:$0xff] %v1017
    %1029 = vst [vmem:[#allocation8 + $0x10] sm:$0xff] %v1022
    // Predicated region
    $region34: #{tpu_custom_call.1} parent=1 // pred_check
      _
    $region35: #{tpu_custom_call.1} parent=1 // pred_check_branch
      %1031 = sbr.rel (0) target = $region37
    $region36: #{tpu_custom_call.1} parent=1 // pred_region
      %s1033 = ssub.s32 384, 384
      %1034 = vsyncadd [#allocation4], %s1033
      %s1035 = sshll.u32 [#allocation8], 4
      %s1036 = int_to_ptr.vmem [resolvable:$true] %s1035
      %1041 = dma.vmem_to_hbm [thread:$0]  %s1036, 384, %s5, [#allocation4], 128, 128, 8
    $region37: #{tpu_custom_call.1} parent=1 // pred_fallthru
      _
    // Predicated region
    $region38: #{tpu_custom_call.1} parent=1 // pred_check
      _
    $region39: #{tpu_custom_call.1} parent=1 // pred_check_branch
      %1043 = sbr.rel (0) target = $region41
    $region40: #{tpu_custom_call.1} parent=1 // pred_region
      %1044 = dma.done [#allocation4], 384
    $region41: #{tpu_custom_call.1} parent=1 // pred_fallthru
      _
    %1045 = vsyncpa [#allocation3], 1
    %1046 = vsyncpa [#allocation6], 1
    %1047 = vsyncpa [#allocation4], 1

</llo_original>
